<compile_context>
chip_gen: v5e
topology: v5e:2x2
jax: 0.10.0
libtpu: 0.0.40
codegen_flags: <defaults>
</compile_context>

<pallas_src>
import numpy as np
import jax
import jax.numpy as jnp
from jax.experimental import pallas as pl
from jax.experimental.pallas import tpu as pltpu

_LANE = 128                     # channel padding (lane-dense outputs)
_ROW_ALIGN = 16                 # sublane alignment for bf16 row tiles
_MAX_TILE_N = 2048
_VMEM_BUDGET = 40 * 1024 * 1024  # per-kernel block budget (fits v7x 64 MiB VMEM)
_VMEM_CAP = 56 * 1024 * 1024
_BN_EPS = 1e-3


def _round_up(v, m):
    return ((v + m - 1) // m) * m


# ----------------------------------------------------------------------------
# Pallas kernel 1: full-K matmul (+bias/ReLU) with optional BN partial sums
# ----------------------------------------------------------------------------
def _make_matmul_kernel(add_bias, emit_stats, final_relu, cout_pad):
    """out = x @ w (+bias)(+relu); optionally emit per-tile (sum, sumsq).

    Single grid axis over row tiles, full contraction per step -> the weight
    block index is constant (VMEM resident), there is no k accumulation and no
    pl.program_id / pl.when (safe under the CPU interpret fallback too)."""
    def kernel(*refs):
        it = iter(refs)
        x_ref = next(it)
        w_ref = next(it)
        b_ref = next(it) if add_bias else None
        y_ref = next(it)
        s_ref = next(it) if emit_stats else None

        acc = jnp.dot(x_ref[...], w_ref[...],
                      preferred_element_type=jnp.float32)
        if add_bias:
            acc = acc + b_ref[...]
        if final_relu:
            acc = jnp.maximum(acc, 0.0)
        y_ref[...] = acc.astype(y_ref.dtype)
        if emit_stats:
            # Padded rows of x are all-zero, so they contribute nothing to the
            # sums -> no row masking / iota needed. Row 0 = sum, row 1 = sumsq.
            s = jnp.sum(acc, axis=0, keepdims=True)
            ss = jnp.sum(acc * acc, axis=0, keepdims=True)
            s_ref[...] = jnp.concatenate(
                [s, ss, jnp.zeros((6, cout_pad), jnp.float32)], axis=0)
    return kernel


# ----------------------------------------------------------------------------
# Pallas kernel 2: out = [relu]( y * scale + shift [+ residual] )  (bf16 store)
# ----------------------------------------------------------------------------
def _make_bn_kernel(has_residual, apply_relu):
    def kernel(*refs):
        it = iter(refs)
        y_ref = next(it)
        sc_ref = next(it)
        sh_ref = next(it)
        r_ref = next(it) if has_residual else None
        o_ref = next(it)
        y = y_ref[...].astype(jnp.float32) * sc_ref[...] + sh_ref[...]
        if has_residual:
            y = y + r_ref[...].astype(jnp.float32)
        if apply_relu:
            y = jnp.maximum(y, 0.0)
        o_ref[...] = y.astype(o_ref.dtype)
    return kernel


# ----------------------------------------------------------------------------
# Per-layer row tiling against a VMEM budget
# ----------------------------------------------------------------------------
def _choose_row_tiling(n_out, k_pad, cout_pad):
    n_out = max(int(n_out), 1)

    def blocks_bytes(t):
        return (2 * t * k_pad * 2              # x bf16, double buffered
                + 2 * k_pad * cout_pad * 2     # w bf16 (grid-invariant)
                + 2 * t * cout_pad * 4         # y (worst case f32), 2 bufs
                + 2 * 8 * cout_pad * 4         # stats
                + 4 * cout_pad * 4)            # bias / scale / shift

    tile_n = _MAX_TILE_N
    while tile_n > _ROW_ALIGN and blocks_bytes(tile_n) > _VMEM_BUDGET:
        tile_n //= 2
    # keep >= 2 row tiles when possible so the "parallel" row axis can feed
    # both v7x TensorCores (v5e/v6e: harmless)
    if n_out > 2 * _ROW_ALIGN:
        tile_n = min(tile_n, _round_up((n_out + 1) // 2, _ROW_ALIGN))
    tile_n = max(min(tile_n, _round_up(n_out, _ROW_ALIGN)), _ROW_ALIGN)
    n_pad = _round_up(n_out, tile_n)
    return tile_n, n_pad, n_pad // tile_n, blocks_bytes(tile_n)


# ----------------------------------------------------------------------------
# Generic sparse conv = gather (glue) + Pallas matmul + Pallas BN/res/ReLU
# ----------------------------------------------------------------------------
def sparse_conv(feats, nbr_idx, weight, bias=None, residual=None,
                apply_bn=True, apply_relu=True, eps=_BN_EPS):
    """feats: (N_in, Cin) array or tuple of arrays sharing N_in (multi-stream
    input avoids materializing the decoder skip-concat); nbr_idx: (N_out, K3)
    numpy int32 (-1 = empty) or None for an identity 1x1 conv;
    weight: (K3, sum(Cin), Cout).  Returns (N_out, Cout): bf16 when apply_bn
    else f32."""
    if not isinstance(feats, (tuple, list)):
        feats = (feats,)
    cins = [int(f.shape[1]) for f in feats]
    cin_total = sum(cins)
    K3, w_cin, Cout = weight.shape
    assert w_cin == cin_total
    N_in = int(feats[0].shape[0])
    N_out = N_in if nbr_idx is None else int(nbr_idx.shape[0])

    add_bias = bias is not None
    assert not (add_bias and apply_bn)          # BN partials assume bias-free y
    final_relu = apply_relu and not apply_bn

    cout_pad = _round_up(Cout, _LANE)
    k_total = K3 * cin_total
    k_pad = _round_up(k_total, _LANE)
    tile_n, n_pad, n_tiles, blk_bytes = _choose_row_tiling(N_out, k_pad,
                                                           cout_pad)
    vmem1 = int(min(max(blk_bytes + (8 << 20), 24 << 20), _VMEM_CAP))

    # ---- (n_pad, k_pad) bf16 gathered activation matrix (XLA glue) ----
    # TODO(synk): move this gather in-kernel (VMEM-resident feat + index tiles)
    #             to avoid the HBM round-trip of the K3-expanded matrix.
    if nbr_idx is None:
        x = (feats[0].astype(jnp.bfloat16) if len(feats) == 1 else
             jnp.concatenate([f.astype(jnp.bfloat16) for f in feats], axis=1))
    else:
        idx = np.where(nbr_idx < 0, N_in, nbr_idx).astype(np.int32)
        if n_pad > N_out:                        # pad rows via sentinel index
            idx = np.concatenate(
                [idx, np.full((n_pad - N_out, K3), N_in, np.int32)], axis=0)
        idx_dev = jnp.asarray(idx)
        parts = []
        for f, c in zip(feats, cins):
            f_ext = jnp.concatenate(
                [f.astype(jnp.bfloat16), jnp.zeros((1, c), jnp.bfloat16)],
                axis=0)
            parts.append(jnp.take(f_ext, idx_dev, axis=0))   # (n_pad, K3, c)
        x = parts[0] if len(parts) == 1 else jnp.concatenate(parts, axis=-1)
        x = x.reshape(n_pad, k_total)
    pad_r, pad_c = n_pad - x.shape[0], k_pad - x.shape[1]
    if pad_r or pad_c:
        x = jnp.pad(x, ((0, pad_r), (0, pad_c)))

    w = jnp.pad(weight.reshape(k_total, Cout).astype(jnp.bfloat16),
                ((0, k_pad - k_total), (0, cout_pad - Cout)))

    in_specs = [pl.BlockSpec((tile_n, k_pad), lambda i: (i, 0)),
                pl.BlockSpec((k_pad, cout_pad), lambda i: (0, 0))]
    inputs = [x, w]
    if add_bias:
        b = jnp.pad(jnp.reshape(bias, (1, Cout)).astype(jnp.float32),
                    ((0, 0), (0, cout_pad - Cout)))
        in_specs.append(pl.BlockSpec((1, cout_pad), lambda i: (0, 0)))
        inputs.append(b)

    y_dtype = jnp.bfloat16 if apply_bn else jnp.float32
    out_shapes = [jax.ShapeDtypeStruct((n_pad, cout_pad), y_dtype)]
    out_specs = [pl.BlockSpec((tile_n, cout_pad), lambda i: (i, 0))]
    if apply_bn:
        out_shapes.append(
            jax.ShapeDtypeStruct((n_tiles * 8, cout_pad), jnp.float32))
        out_specs.append(pl.BlockSpec((8, cout_pad), lambda i: (i, 0)))

    result = pl.pallas_call(
        _make_matmul_kernel(add_bias, apply_bn, final_relu, cout_pad),
        out_shape=tuple(out_shapes) if apply_bn else out_shapes[0],
        grid=(n_tiles,),
        in_specs=in_specs,
        out_specs=tuple(out_specs) if apply_bn else out_specs[0],
        compiler_params=pltpu.CompilerParams(
            dimension_semantics=("parallel",),
            vmem_limit_bytes=vmem1),
    )(*inputs)

    if not apply_bn:
        return result[:N_out, :Cout]

    y, stats = result
    # tiny global reduction of per-tile partials -> training-mode BN stats
    # (gamma=1, beta=0, biased variance, eps=1e-3: fresh torch BatchNorm1d)
    st = stats.reshape(n_tiles, 8, cout_pad)
    n_f = float(max(N_out, 1))
    mean = jnp.sum(st[:, 0, :], axis=0) / n_f
    # TODO(synk): E[x^2]-E[x]^2 can cancel for huge N / non-centered data;
    #             switch to a shifted/Welford combine if that ever matters.
    var = jnp.maximum(jnp.sum(st[:, 1, :], axis=0) / n_f - mean * mean, 0.0)
    inv_std = jax.lax.rsqrt(var + eps)
    scale = inv_std.reshape(1, cout_pad)                # gamma = 1
    shift = (-mean * inv_std).reshape(1, cout_pad)      # beta = 0

    has_res = residual is not None
    inputs2 = [y, scale, shift]
    in_specs2 = [pl.BlockSpec((tile_n, cout_pad), lambda i: (i, 0)),
                 pl.BlockSpec((1, cout_pad), lambda i: (0, 0)),
                 pl.BlockSpec((1, cout_pad), lambda i: (0, 0))]
    if has_res:
        r = jnp.pad(residual.astype(jnp.bfloat16),
                    ((0, n_pad - residual.shape[0]),
                     (0, cout_pad - residual.shape[1])))
        inputs2.append(r)
        in_specs2.append(pl.BlockSpec((tile_n, cout_pad), lambda i: (i, 0)))
    vmem2 = int(min(max(8 * tile_n * cout_pad * 2 + (4 << 20), 16 << 20),
                    _VMEM_CAP))

    out2 = pl.pallas_call(
        _make_bn_kernel(has_res, apply_relu),
        out_shape=jax.ShapeDtypeStruct((n_pad, cout_pad), jnp.bfloat16),
        grid=(n_tiles,),
        in_specs=in_specs2,
        out_specs=pl.BlockSpec((tile_n, cout_pad), lambda i: (i, 0)),
        compiler_params=pltpu.CompilerParams(
            dimension_semantics=("parallel",),
            vmem_limit_bytes=vmem2),
    )(*inputs2)
    return out2[:N_out, :Cout]


# ----------------------------------------------------------------------------
# Vectorized host-side rulebook construction (glue, == spconv indice building)
# ----------------------------------------------------------------------------
_KEY_BIAS = 8   # keeps neighbour coords nonnegative for key packing


def _pack_keys(batch, coords):
    b = np.asarray(batch, np.int64)
    c = np.asarray(coords, np.int64) + _KEY_BIAS
    return (b << 54) | (c[..., 0] << 36) | (c[..., 1] << 18) | c[..., 2]


def build_subm_rulebook(coords, batch, ksize):
    """SubMConv3d rulebook (output coords == input coords), vectorized."""
    coords = np.asarray(coords, np.int64)
    batch = np.asarray(batch, np.int64)
    r = ksize // 2
    rng = np.arange(-r, r + 1, dtype=np.int64)
    offs = np.stack(np.meshgrid(rng, rng, rng, indexing="ij"),
                    axis=-1).reshape(-1, 3)
    N, K3 = coords.shape[0], offs.shape[0]
    keys = _pack_keys(batch, coords)
    order = np.argsort(keys, kind="stable")
    skeys = keys[order]
    nb_coords = coords[:, None, :] + offs[None, :, :]
    nb_keys = _pack_keys(np.broadcast_to(batch[:, None], (N, K3)), nb_coords)
    pos = np.searchsorted(skeys, nb_keys)
    pos_c = np.minimum(pos, N - 1)
    found = skeys[pos_c] == nb_keys
    return np.where(found, order[pos_c], -1).astype(np.int32)


def build_down_up_rulebooks(coords, batch):
    """SparseConv3d(ks=2, s=2) rulebook and its SparseInverseConv3d inverse."""
    coords = np.asarray(coords, np.int64)
    batch = np.asarray(batch, np.int64)
    N = coords.shape[0]
    coarse = coords // 2
    rem = coords - 2 * coarse
    keys = _pack_keys(batch, coarse)
    _, first_idx, parent = np.unique(keys, return_index=True,
                                     return_inverse=True)
    parent = np.asarray(parent).reshape(-1)
    M = first_idx.shape[0]
    out_coords = coarse[first_idx]
    out_batch = batch[first_idx]
    koff = (rem[:, 0] * 4 + rem[:, 1] * 2 + rem[:, 2]).astype(np.int64)
    nbr_down = np.full((M, 8), -1, np.int32)   # coarse output <- fine inputs
    nbr_down[parent, koff] = np.arange(N, dtype=np.int32)
    nbr_up = np.full((N, 8), -1, np.int32)     # fine output  <- coarse inputs
    nbr_up[np.arange(N), koff] = parent.astype(np.int32)
    return out_coords, out_batch, nbr_down, nbr_up


# ----------------------------------------------------------------------------
# Parameters (deterministic init; matches __init__ shapes of SpUNetBase)
# ----------------------------------------------------------------------------
class KeyGen:
    def __init__(self, key):
        self.key, self.i = key, 0

    def __call__(self):
        self.i += 1
        return jax.random.fold_in(self.key, self.i)


def trunc_normal(key, shape, std=0.02):
    return jax.random.truncated_normal(key, -2.0, 2.0, shape, jnp.float32) * std


def make_block(kg, in_c, c):
    return {
        "w1": trunc_normal(kg(), (27, in_c, c)),
        "w2": trunc_normal(kg(), (27, c, c)),
        "proj_w": trunc_normal(kg(), (1, in_c, c)) if in_c != c else None,
    }


def init_params(key, in_channels, num_classes, base_channels, channels, layers):
    num_stages = len(layers) // 2
    kg = KeyGen(key)
    params = {"conv_input": trunc_normal(kg(), (125, in_channels, base_channels))}
    down_w, enc_blocks, up_w, dec_blocks = [], [], [], []
    enc_channels = base_channels
    dec_channels = channels[-1]
    for s in range(num_stages):
        down_w.append(trunc_normal(kg(), (8, enc_channels, channels[s])))
        enc_blocks.append([make_block(kg, channels[s], channels[s])
                           for _ in range(layers[s])])
        up_w.append(trunc_normal(
            kg(), (8, channels[len(channels) - s - 2], dec_channels)))
        dec_blocks.append([
            make_block(kg, dec_channels + enc_channels if i == 0 else dec_channels,
                       dec_channels)
            for i in range(layers[len(channels) - s - 1])])
        enc_channels = channels[s]
        dec_channels = channels[len(channels) - s - 2]
    params.update(down=down_w, enc=enc_blocks, up=up_w, dec=dec_blocks)
    params["final_w"] = trunc_normal(kg(), (1, channels[-1], num_classes))
    params["final_b"] = jnp.zeros((num_classes,), jnp.float32)
    return params


# ----------------------------------------------------------------------------
# Forward
# ----------------------------------------------------------------------------
def basic_block(feats, nbr3, blk):
    if blk["proj_w"] is not None:
        res = sparse_conv(feats, None, blk["proj_w"],
                          apply_bn=True, apply_relu=False)
    elif isinstance(feats, (tuple, list)):
        res = jnp.concatenate([f.astype(jnp.bfloat16) for f in feats], axis=1)
    else:
        res = feats
    out = sparse_conv(feats, nbr3, blk["w1"], apply_bn=True, apply_relu=True)
    out = sparse_conv(out, nbr3, blk["w2"], residual=res,
                      apply_bn=True, apply_relu=True)
    return out


def spunet_forward(params, feat, grid_coord, batch, channels, layers):
    num_stages = len(layers) // 2

    # coordinate hierarchy + rulebooks (vectorized host glue == spconv indices)
    coords_levels = [np.asarray(grid_coord, np.int64)]
    batch_levels = [np.asarray(batch, np.int64)]
    nbr_down_list, nbr_up_list = [], []
    for _ in range(num_stages):
        oc, ob, nd, nu = build_down_up_rulebooks(coords_levels[-1],
                                                 batch_levels[-1])
        coords_levels.append(oc)
        batch_levels.append(ob)
        nbr_down_list.append(nd)
        nbr_up_list.append(nu)
    subm3 = [build_subm_rulebook(coords_levels[l], batch_levels[l], 3)
             for l in range(num_stages + 1)]
    subm5_0 = build_subm_rulebook(coords_levels[0], batch_levels[0], 5)

    # conv_input (SubMConv3d k=5 + BN + ReLU)
    x = sparse_conv(feat, subm5_0, params["conv_input"],
                    apply_bn=True, apply_relu=True)
    skips = [x]
    # encoder
    for s in range(num_stages):
        x = sparse_conv(x, nbr_down_list[s], params["down"][s],
                        apply_bn=True, apply_relu=True)
        for blk in params["enc"][s]:
            x = basic_block(x, subm3[s + 1], blk)
        skips.append(x)
    x = skips.pop(-1)
    # decoder (skip-concat is never materialized: two-stream first block)
    for s in reversed(range(num_stages)):
        x = sparse_conv(x, nbr_up_list[s], params["up"][s],
                        apply_bn=True, apply_relu=True)
        skip = skips.pop(-1)
        blocks = params["dec"][s]
        x = basic_block((x, skip), subm3[s], blocks[0])
        for blk in blocks[1:]:
            x = basic_block(x, subm3[s], blk)
    # final 1x1 conv with bias, no BN/ReLU
    x = sparse_conv(x, None, params["final_w"], bias=params["final_b"],
                    apply_bn=False, apply_relu=False)
    return x


# ----------------------------------------------------------------------------
if __name__ == "__main__":
    # small config consistent with SpUNetBase(in_channels, num_classes, ...)
    in_channels = 4
    num_classes = 5
    base_channels = 16
    channels = (16, 32, 32, 16)
    layers = (1, 1, 1, 1)

    key = jax.random.PRNGKey(0)
    k_c0, k_c1, k_feat, k_param = jax.random.split(key, 4)

    # batch of 2 point clouds, 20 unique voxels each in a 16^3 grid
    n_per = 20
    lin0 = jax.random.choice(k_c0, 16 ** 3, (n_per,), replace=False)
    lin1 = jax.random.choice(k_c1, 16 ** 3, (n_per,), replace=False)
    lin = np.asarray(jax.device_get(jnp.concatenate([lin0, lin1])), np.int64)
    grid_coord = np.stack([lin // 256, (lin // 16) % 16, lin % 16], axis=1)
    offset = np.array([n_per, 2 * n_per])
    batch = np.repeat(np.arange(len(offset)),
                      np.diff(np.concatenate([[0], offset])))
    feat = jax.random.normal(k_feat, (2 * n_per, in_channels), jnp.float32)

    params = init_params(k_param, in_channels, num_classes, base_channels,
                         channels, layers)

    out = spunet_forward(params, feat, grid_coord, batch, channels, layers)
    out = jax.block_until_ready(out)
    assert out.shape == (2 * n_per, num_classes)
    assert out.dtype == jnp.float32
    assert bool(jnp.all(jnp.isfinite(out)))
    print("KERNEL_OK")
</pallas_src>

<mosaic_0001>
module attributes {stable_mosaic.version = 11 : i64} {
  func.func @kernel(%arg0: i32, %arg1: memref<32x512xbf16, #tpu.memory_space<vmem>>, %arg2: memref<512x128xbf16, #tpu.memory_space<vmem>>, %arg3: memref<32x128xbf16, #tpu.memory_space<vmem>>, %arg4: memref<8x128xf32, #tpu.memory_space<vmem>>) attributes {dimension_semantics = [#tpu.dimension_semantics<parallel>], iteration_bounds = array<i64: 2>, scalar_prefetch = 0 : i64, scratch_operands = 0 : i64, tpu.core_type = #tpu.core_type<tc>, window_params = [{transform_indices = @transform_0, window_bounds = array<i64: 32, 512>}, {pipeline_mode = #tpu.pipeline_mode<synchronous>, transform_indices = @transform_1, window_bounds = array<i64: 512, 128>}, {transform_indices = @transform_2, window_bounds = array<i64: 32, 128>}, {transform_indices = @transform_3, window_bounds = array<i64: 8, 128>}]} {
    %c0 = arith.constant 0 : index
    %c0_0 = arith.constant 0 : index
    %0 = vector.load %arg1[%c0, %c0_0] : memref<32x512xbf16, #tpu.memory_space<vmem>>, vector<32x512xbf16>
    %c0_1 = arith.constant 0 : index
    %c0_2 = arith.constant 0 : index
    %1 = vector.load %arg2[%c0_1, %c0_2] : memref<512x128xbf16, #tpu.memory_space<vmem>>, vector<512x128xbf16>
    %cst = arith.constant dense<0.000000e+00> : vector<32x128xf32>
    %2 = tpu.matmul %0, %1, %cst {dimension_numbers = #tpu.dot_dimension_numbers<[1], [0], [0], [1], [0, 0, 1, 1], [], []>} : vector<32x512xbf16>, vector<512x128xbf16>, vector<32x128xf32> -> vector<32x128xf32>
    %3 = arith.truncf %2 : vector<32x128xf32> to vector<32x128xbf16>
    %c0_3 = arith.constant 0 : index
    %c0_4 = arith.constant 0 : index
    %4 = vector.load %arg3[%c0_3, %c0_4] : memref<32x128xbf16, #tpu.memory_space<vmem>>, vector<32x128xbf16>
    tpu.vector_store %arg3[%c0_3, %c0_4], %3 {strides = array<i32>} : memref<32x128xbf16, #tpu.memory_space<vmem>>, vector<32x128xbf16>,
    %cst_5 = arith.constant dense<0.000000e+00> : vector<128xf32>
    %5 = vector.multi_reduction <add>, %2, %cst_5 [0] : vector<32x128xf32> to vector<128xf32>
    %6 = vector.shape_cast %5 : vector<128xf32> to vector<1x128xf32>
    %7 = arith.mulf %2, %2 : vector<32x128xf32>
    %cst_6 = arith.constant dense<0.000000e+00> : vector<128xf32>
    %8 = vector.multi_reduction <add>, %7, %cst_6 [0] : vector<32x128xf32> to vector<128xf32>
    %9 = vector.shape_cast %8 : vector<128xf32> to vector<1x128xf32>
    %cst_7 = arith.constant 0.000000e+00 : f32
    %10 = vector.broadcast %cst_7 : f32 to vector<6x128xf32>
    %11 = tpu.concatenate %6, %9, %10 in 0 : vector<1x128xf32>, vector<1x128xf32>, vector<6x128xf32> -> vector<8x128xf32>
    %c0_8 = arith.constant 0 : index
    %c0_9 = arith.constant 0 : index
    %12 = vector.load %arg4[%c0_8, %c0_9] : memref<8x128xf32, #tpu.memory_space<vmem>>, vector<8x128xf32>
    tpu.vector_store %arg4[%c0_8, %c0_9], %11 {strides = array<i32>} : memref<8x128xf32, #tpu.memory_space<vmem>>, vector<8x128xf32>,
    return
  }
  func.func @transform_0(%arg0: i32) -> (i32, i32) {
    %c0_i32 = arith.constant 0 : i32
    %c0_i32_0 = arith.constant 0 : i32
    return %arg0, %c0_i32 : i32, i32
  }
  func.func @transform_1(%arg0: i32) -> (i32, i32) {
    %c0_i32 = arith.constant 0 : i32
    %c0_i32_0 = arith.constant 0 : i32
    %c0_i32_1 = arith.constant 0 : i32
    return %c0_i32, %c0_i32_0 : i32, i32
  }
  func.func @transform_2(%arg0: i32) -> (i32, i32) {
    %c0_i32 = arith.constant 0 : i32
    %c0_i32_0 = arith.constant 0 : i32
    return %arg0, %c0_i32 : i32, i32
  }
  func.func @transform_3(%arg0: i32) -> (i32, i32) {
    %c0_i32 = arith.constant 0 : i32
    %c0_i32_0 = arith.constant 0 : i32
    return %arg0, %c0_i32 : i32, i32
  }
}

</mosaic_0001>

<llo_original>
// kernel: tpu_custom_call.1
$region0: #{tpu_custom_call.1}
  #allocation0 [shape = 'u32[]', space=smem, size = 0x4, offset = 0x4, fixed_abs, tag = 'smem constant byte address 0x4 - core index']
  #allocation1 [shape = 'u32[72,128]{1,0:T(1,128)}', space=vmem, size = 0x9000, scoped, tag = 'internal scratch']
  %s0 = inlined_call_operand.hbm [shape: bf16[64,512], index: 0, kind: input, shape index: {}]
  %s1 = inlined_call_operand.hbm [shape: bf16[512,128], index: 1, kind: input, shape index: {}]
  %s2 = inlined_call_operand.hbm [shape: bf16[64,128], index: 2, kind: output, shape index: {0}]
  %s3 = inlined_call_operand.hbm [shape: f32[16,128], index: 3, kind: output, shape index: {1}]
  %4 = xla_tuple %s2, %s3
  %s5 = sld [smem:[#allocation0]]
  $region57: #{tpu_custom_call.1} parent=0
    _
  %s7 = ssub.s32 1, %s5
  %s8 = scalar_select 0, %s7, %s5
  $region1: #{tpu_custom_call.1} parent=0
    #allocation2 [shape = 'u8[65536]{0}', space=vmem, size = 0x10000, scoped, tag = 'input window, operand 0']
    #allocation3 [shape = 's32[2]{0}', space=sflag, size = 0x8, scoped, tag = 'scoped memory for tpu_custom_call.1']
    #allocation4 [shape = 's32[2]{0}', space=sflag, size = 0x8, scoped, tag = 'scoped memory for tpu_custom_call.1']
    #allocation5 [shape = 'u8[131072]{0}', space=vmem, size = 0x20000, scoped, tag = 'input window, operand 1, single buffered']
    #allocation6 [shape = 's32[1]{0}', space=sflag, size = 0x4, scoped, tag = 'scoped memory for tpu_custom_call.1']
    #allocation7 [shape = 'u8[16384]{0}', space=vmem, size = 0x4000, scoped, tag = 'output window, operand 0']
    #allocation8 [shape = 'u8[8192]{0}', space=vmem, size = 0x2000, scoped, tag = 'output window, operand 1']
    #allocation9 [shape = 's32[2]{0}', space=sflag, size = 0x8, scoped, tag = 'scoped memory for tpu_custom_call.1']
    %9 = vsyncpa [#allocation3], 0
    %s10 = scalar_lea.sflag [#allocation3], 1
    %11 = vsyncpa %s10, 0
    %12 = vsyncpa [#allocation6], 0
    %13 = vsyncpa [#allocation4], 0
    %s14 = scalar_lea.sflag [#allocation4], 1
    %15 = vsyncpa %s14, 0
    %16 = vsyncpa [#allocation9], 0
    %s17 = scalar_lea.sflag [#allocation9], 1
    %18 = vsyncpa %s17, 0
    loop: start=0, step=1, limit=4
    $region2: #{tpu_custom_call.1} parent=1 // loop_pre_header
      _
    $region3: #{tpu_custom_call.1} parent=1 // loop_header
      %s20 = sphi 0, %s24
      %p21 = scmp.ge.s32.totalorder %s20, 4
      %s30 = sphi 0, %s32
      %s33 = sphi 0, %s30
      %s34 = sphi 0, %s33
      %s50 = sphi 0, %s34
      %s54 = sphi 0, %s54
      %s56 = sphi 0, %s54
      %s57 = sphi 0, %s56
      %s71 = sphi 0, %s57
      %s77 = sphi 0, %s79
      %s80 = sphi 0, %s77
      %s81 = sphi 0, %s80
      %s97 = sphi 0, %s81
      %s103 = sphi 0, %s105
      %s106 = sphi 0, %s103
      %s107 = sphi 0, %s106
      %s123 = sphi 0, %s107
    $region4: #{tpu_custom_call.1} parent=1 // loop_header_branch
      %23 = sbr.rel (%p21) target = $region8
    $region5: #{tpu_custom_call.1} parent=1 // loop_body
      %s25 = ssub.s32 %s20, 1
      %s26 = ssub.s32 %s20, 2
      %s27 = sadd.s32 %s20, 1
      %s28 = ssub.s32 %s20, %s27
      %p29 = scmp.eq.s32.totalorder %s28, 0
      %s31 = sadd.s32 %s30, 1
      %s32 = scalar_select %p29, %s30, %s31
      %p35 = pneg %p29
      %p36 = scmp.eq.s32.totalorder %s20, 1
      %p37 = por %p35, %p36
      %p38 = scmp.ne.s32.totalorder %s30, %s33
      %p39 = scmp.eq.s32.totalorder %s20, 0
      %p40 = por %p38, %p39
      %p41 = scmp.ne.s32.totalorder %s30, %s33
      %p42 = scmp.eq.s32.totalorder %s25, 1
      %p43 = por %p41, %p42
      %p44 = scmp.ne.s32.totalorder %s33, %s34
      %p45 = scmp.eq.s32.totalorder %s25, 0
      %p46 = por %p44, %p45
      %p47 = scmp.ne.s32.totalorder %s33, %s34
      %p48 = scmp.eq.s32.totalorder %s26, 1
      %p49 = por %p47, %p48
      %p51 = scmp.ne.s32.totalorder %s34, %s50
      %p52 = scmp.eq.s32.totalorder %s26, 0
      %p53 = por %p51, %p52
      %s55 = sadd.s32 %s54, 1
      %p58 = scmp.eq.s32.totalorder %s20, 1
      %p59 = scmp.ne.s32.totalorder %s54, %s56
      %p60 = scmp.eq.s32.totalorder %s20, 0
      %p61 = por %p59, %p60
      %p62 = scmp.ne.s32.totalorder %s54, %s56
      %p63 = scmp.eq.s32.totalorder %s25, 1
      %p64 = por %p62, %p63
      %p65 = scmp.ne.s32.totalorder %s56, %s57
      %p66 = scmp.eq.s32.totalorder %s25, 0
      %p67 = por %p65, %p66
      %p68 = scmp.ne.s32.totalorder %s56, %s57
      %p69 = scmp.eq.s32.totalorder %s26, 1
      %p70 = por %p68, %p69
      %p72 = scmp.ne.s32.totalorder %s57, %s71
      %p73 = scmp.eq.s32.totalorder %s26, 0
      %p74 = por %p72, %p73
      %s75 = ssub.s32 %s20, %s27
      %p76 = scmp.eq.s32.totalorder %s75, 0
      %s78 = sadd.s32 %s77, 1
      %s79 = scalar_select %p76, %s77, %s78
      %p82 = pneg %p76
      %p83 = scmp.eq.s32.totalorder %s20, 1
      %p84 = por %p82, %p83
      %p85 = scmp.ne.s32.totalorder %s77, %s80
      %p86 = scmp.eq.s32.totalorder %s20, 0
      %p87 = por %p85, %p86
      %p88 = scmp.ne.s32.totalorder %s77, %s80
      %p89 = scmp.eq.s32.totalorder %s25, 1
      %p90 = por %p88, %p89
      %p91 = scmp.ne.s32.totalorder %s80, %s81
      %p92 = scmp.eq.s32.totalorder %s25, 0
      %p93 = por %p91, %p92
      %p94 = scmp.ne.s32.totalorder %s80, %s81
      %p95 = scmp.eq.s32.totalorder %s26, 1
      %p96 = por %p94, %p95
      %p98 = scmp.ne.s32.totalorder %s81, %s97
      %p99 = scmp.eq.s32.totalorder %s26, 0
      %p100 = por %p98, %p99
      %s101 = ssub.s32 %s20, %s27
      %p102 = scmp.eq.s32.totalorder %s101, 0
      %s104 = sadd.s32 %s103, 1
      %s105 = scalar_select %p102, %s103, %s104
      %p108 = pneg %p102
      %p109 = scmp.eq.s32.totalorder %s20, 1
      %p110 = por %p108, %p109
      %p111 = scmp.ne.s32.totalorder %s103, %s106
      %p112 = scmp.eq.s32.totalorder %s20, 0
      %p113 = por %p111, %p112
      %p114 = scmp.ne.s32.totalorder %s103, %s106
      %p115 = scmp.eq.s32.totalorder %s25, 1
      %p116 = por %p114, %p115
      %p117 = scmp.ne.s32.totalorder %s106, %s107
      %p118 = scmp.eq.s32.totalorder %s25, 0
      %p119 = por %p117, %p118
      %p120 = scmp.ne.s32.totalorder %s106, %s107
      %p121 = scmp.eq.s32.totalorder %s26, 1
      %p122 = por %p120, %p121
      %p124 = scmp.ne.s32.totalorder %s107, %s123
      %p125 = scmp.eq.s32.totalorder %s26, 0
      %p126 = por %p124, %p125
      %p127 = scmp.le.s32.totalorder 1, %s20
      %p128 = scmp.lt.s32.totalorder %s20, 3
      %p129 = pnand %p127, %p128
      %p130 = pneg %p129
      // Predicated region
      $region9: #{tpu_custom_call.1} parent=5 // pred_check
        _
      $region10: #{tpu_custom_call.1} parent=5 // pred_check_branch
        %132 = sbr.rel (%p129) target = $region12
      $region11: #{tpu_custom_call.1} parent=5 // pred_region
        %s133 = ssub.s32 %s20, 1
        // Predicated region
        $region13: #{tpu_custom_call.1} parent=11 // pred_check
          %p134 = pneg %p67
        $region14: #{tpu_custom_call.1} parent=11 // pred_check_branch
          %136 = sbr.rel (%p134) target = $region16
        $region15: #{tpu_custom_call.1} parent=11 // pred_region
          %138 = vsyncadd [#allocation6], 0
          %s139 = sshll.u32 %s1, 4
          %s140 = int_to_ptr.hbm [resolvable:$true] %s139
          %s141 = sshll.u32 [#allocation5], 4
          %s142 = int_to_ptr.vmem [resolvable:$true] %s141
          %147 = dma.hbm_to_vmem [thread:$0]  %s140, 4096, %s142, [#allocation6], 64, 64, 4
        $region16: #{tpu_custom_call.1} parent=11 // pred_fallthru
          _
      $region12: #{tpu_custom_call.1} parent=5 // pred_fallthru
        _
      %p148 = scmp.lt.s32.totalorder %s20, 2
      // Predicated region
      $region17: #{tpu_custom_call.1} parent=5 // pred_check
        %p149 = pneg %p148
      $region18: #{tpu_custom_call.1} parent=5 // pred_check_branch
        %151 = sbr.rel (%p149) target = $region20
      $region19: #{tpu_custom_call.1} parent=5 // pred_region
        // Predicated region
        $region21: #{tpu_custom_call.1} parent=19 // pred_check
          %p152 = pneg %p40
        $region22: #{tpu_custom_call.1} parent=19 // pred_check_branch
          %154 = sbr.rel (%p152) target = $region24
        $region23: #{tpu_custom_call.1} parent=19 // pred_region
          %s155 = sand.u32 %s30, 1
          %s156 = scalar_lea.sflag [#allocation3], %s155
          %s157 = sand.u32 %s30, 1
          %s158 = smul.addr %s157, 64
          %s159 = scalar_lea.vmem [#allocation2], %s158
          %s160 = smul.u32 4, %s20
          %162 = vsyncadd %s156, 0
          %s163 = smul.addr %s160, 4
          %s164 = smul.addr %s163, 4
          %s165 = scalar_lea.hbm %s0, %s164
          %s166 = sshll.u32 %s165, 4
          %s167 = int_to_ptr.hbm [resolvable:$true] %s166
          %s168 = sshll.u32 %s159, 4
          %s169 = int_to_ptr.vmem [resolvable:$true] %s168
          %174 = dma.hbm_to_vmem [thread:$0]  %s167, 1024, %s169, %s156, 256, 256, 16
        $region24: #{tpu_custom_call.1} parent=19 // pred_fallthru
          _
      $region20: #{tpu_custom_call.1} parent=5 // pred_fallthru
        _
      %p175 = scmp.le.s32.totalorder 1, %s20
      %p176 = scmp.lt.s32.totalorder %s20, 3
      %p177 = pnand %p175, %p176
      %p178 = pneg %p177
      // Predicated region
      $region25: #{tpu_custom_call.1} parent=5 // pred_check
        _
      $region26: #{tpu_custom_call.1} parent=5 // pred_check_branch
        %180 = sbr.rel (%p177) target = $region28
      $region27: #{tpu_custom_call.1} parent=5 // pred_region
        %s181 = ssub.s32 %s20, 1
        %s182 = sand.u32 %s33, 1
        %s183 = scalar_lea.sflag [#allocation3], %s182
        %s184 = sand.u32 %s33, 1
        %s185 = smul.addr %s184, 64
        %s186 = scalar_lea.vmem [#allocation2], %s185
        // Predicated region
        $region29: #{tpu_custom_call.1} parent=27 // pred_check
          %p187 = pneg %p46
        $region30: #{tpu_custom_call.1} parent=27 // pred_check_branch
          %189 = sbr.rel (%p187) target = $region32
        $region31: #{tpu_custom_call.1} parent=27 // pred_region
          %191 = dma.done %s183, 1024
        $region32: #{tpu_custom_call.1} parent=27 // pred_fallthru
          _
        // Predicated region
        $region33: #{tpu_custom_call.1} parent=27 // pred_check
          %p192 = pneg %p67
        $region34: #{tpu_custom_call.1} parent=27 // pred_check_branch
          %194 = sbr.rel (%p192) target = $region36
        $region35: #{tpu_custom_call.1} parent=27 // pred_region
          %196 = dma.done [#allocation6], 4096
        $region36: #{tpu_custom_call.1} parent=27 // pred_fallthru
          _
        %s197 = sand.u32 %s33, 1
        %s198 = scalar_lea.sflag [#allocation3], %s197
        %s199 = sand.u32 %s33, 1
        %s200 = smul.addr %s199, 64
        %s201 = scalar_lea.vmem [#allocation2], %s200
        %p202 = pneg %p46
        %p203 = pneg %p43
        %p204 = pneg %p67
        %p205 = pneg %p64
        %p206 = pneg %p93
        %p207 = pneg %p90
        %s208 = sand.u32 %s80, 1
        %s209 = scalar_lea.sflag [#allocation4], %s208
        %s210 = sand.u32 %s80, 1
        %s211 = smul.addr %s210, 16
        %s212 = scalar_lea.vmem [#allocation7], %s211
        %p213 = pneg %p119
        %p214 = pneg %p116
        %s215 = sand.u32 %s106, 1
        %s216 = scalar_lea.sflag [#allocation9], %s215
        %s217 = sand.u32 %s106, 1
        %s218 = smul.addr %s217, 8
        %s219 = scalar_lea.vmem [#allocation8], %s218
        %s220 = smul.u32 4, %s25
        %s221 = smul.u32 4, %s25
        %v222 = vld [vmem:[%s186] sm:$0xff]
        %v223 = vld [vmem:[%s186 + $0x8] sm:$0xff]
        %v224 = vld [vmem:[%s186 + $0x10] sm:$0xff]
        %v225 = vld [vmem:[%s186 + $0x18] sm:$0xff]
        %v226 = vld [vmem:[%s186 + $0x20] sm:$0xff]
        %v227 = vld [vmem:[%s186 + $0x28] sm:$0xff]
        %v228 = vld [vmem:[%s186 + $0x30] sm:$0xff]
        %v229 = vld [vmem:[%s186 + $0x38] sm:$0xff]
        %v230 = vld [vmem:[#allocation5] sm:$0xf]
        %v231 = vld [vmem:[#allocation5 + $0x4] sm:$0xf]
        %v232 = vld [vmem:[#allocation5 + $0x8] sm:$0xf]
        %v233 = vld [vmem:[#allocation5 + $0xc] sm:$0xf]
        %v234 = vld [vmem:[#allocation5 + $0x10] sm:$0xf]
        %v235 = vld [vmem:[#allocation5 + $0x14] sm:$0xf]
        %v236 = vld [vmem:[#allocation5 + $0x18] sm:$0xf]
        %v237 = vld [vmem:[#allocation5 + $0x1c] sm:$0xf]
        %v238 = vld [vmem:[#allocation5 + $0x20] sm:$0xf]
        %v239 = vld [vmem:[#allocation5 + $0x24] sm:$0xf]
        %v240 = vld [vmem:[#allocation5 + $0x28] sm:$0xf]
        %v241 = vld [vmem:[#allocation5 + $0x2c] sm:$0xf]
        %v242 = vld [vmem:[#allocation5 + $0x30] sm:$0xf]
        %v243 = vld [vmem:[#allocation5 + $0x34] sm:$0xf]
        %v244 = vld [vmem:[#allocation5 + $0x38] sm:$0xf]
        %v245 = vld [vmem:[#allocation5 + $0x3c] sm:$0xf]
        %v246 = vld [vmem:[#allocation5 + $0x40] sm:$0xf]
        %v247 = vld [vmem:[#allocation5 + $0x44] sm:$0xf]
        %v248 = vld [vmem:[#allocation5 + $0x48] sm:$0xf]
        %v249 = vld [vmem:[#allocation5 + $0x4c] sm:$0xf]
        %v250 = vld [vmem:[#allocation5 + $0x50] sm:$0xf]
        %v251 = vld [vmem:[#allocation5 + $0x54] sm:$0xf]
        %v252 = vld [vmem:[#allocation5 + $0x58] sm:$0xf]
        %v253 = vld [vmem:[#allocation5 + $0x5c] sm:$0xf]
        %v254 = vld [vmem:[#allocation5 + $0x60] sm:$0xf]
        %v255 = vld [vmem:[#allocation5 + $0x64] sm:$0xf]
        %v256 = vld [vmem:[#allocation5 + $0x68] sm:$0xf]
        %v257 = vld [vmem:[#allocation5 + $0x6c] sm:$0xf]
        %v258 = vld [vmem:[#allocation5 + $0x70] sm:$0xf]
        %v259 = vld [vmem:[#allocation5 + $0x74] sm:$0xf]
        %v260 = vld [vmem:[#allocation5 + $0x78] sm:$0xf]
        %v261 = vld [vmem:[#allocation5 + $0x7c] sm:$0xf]
        %v262 = vld [vmem:[#allocation5 + $0x80] sm:$0xf]
        %v263 = vld [vmem:[#allocation5 + $0x84] sm:$0xf]
        %v264 = vld [vmem:[#allocation5 + $0x88] sm:$0xf]
        %v265 = vld [vmem:[#allocation5 + $0x8c] sm:$0xf]
        %v266 = vld [vmem:[#allocation5 + $0x90] sm:$0xf]
        %v267 = vld [vmem:[#allocation5 + $0x94] sm:$0xf]
        %v268 = vld [vmem:[#allocation5 + $0x98] sm:$0xf]
        %v269 = vld [vmem:[#allocation5 + $0x9c] sm:$0xf]
        %v270 = vld [vmem:[#allocation5 + $0xa0] sm:$0xf]
        %v271 = vld [vmem:[#allocation5 + $0xa4] sm:$0xf]
        %v272 = vld [vmem:[#allocation5 + $0xa8] sm:$0xf]
        %v273 = vld [vmem:[#allocation5 + $0xac] sm:$0xf]
        %v274 = vld [vmem:[#allocation5 + $0xb0] sm:$0xf]
        %v275 = vld [vmem:[#allocation5 + $0xb4] sm:$0xf]
        %v276 = vld [vmem:[#allocation5 + $0xb8] sm:$0xf]
        %v277 = vld [vmem:[#allocation5 + $0xbc] sm:$0xf]
        %v278 = vld [vmem:[#allocation5 + $0xc0] sm:$0xf]
        %v279 = vld [vmem:[#allocation5 + $0xc4] sm:$0xf]
        %v280 = vld [vmem:[#allocation5 + $0xc8] sm:$0xf]
        %v281 = vld [vmem:[#allocation5 + $0xcc] sm:$0xf]
        %v282 = vld [vmem:[#allocation5 + $0xd0] sm:$0xf]
        %v283 = vld [vmem:[#allocation5 + $0xd4] sm:$0xf]
        %v284 = vld [vmem:[#allocation5 + $0xd8] sm:$0xf]
        %v285 = vld [vmem:[#allocation5 + $0xdc] sm:$0xf]
        %v286 = vld [vmem:[#allocation5 + $0xe0] sm:$0xf]
        %v287 = vld [vmem:[#allocation5 + $0xe4] sm:$0xf]
        %v288 = vld [vmem:[#allocation5 + $0xe8] sm:$0xf]
        %v289 = vld [vmem:[#allocation5 + $0xec] sm:$0xf]
        %v290 = vld [vmem:[#allocation5 + $0xf0] sm:$0xf]
        %v291 = vld [vmem:[#allocation5 + $0xf4] sm:$0xf]
        %v292 = vld [vmem:[#allocation5 + $0xf8] sm:$0xf]
        %v293 = vld [vmem:[#allocation5 + $0xfc] sm:$0xf]
        %v302 = vunpack.c.l.b16 %v222
        %v303 = vunpack.c.h.b16 %v222
        %v304 = vunpack.c.l.b16 %v223
        %v305 = vunpack.c.h.b16 %v223
        %v306 = vunpack.c.l.b16 %v224
        %v307 = vunpack.c.h.b16 %v224
        %v308 = vunpack.c.l.b16 %v225
        %v309 = vunpack.c.h.b16 %v225
        %v310 = vunpack.c.l.b16 %v226
        %v311 = vunpack.c.h.b16 %v226
        %v312 = vunpack.c.l.b16 %v227
        %v313 = vunpack.c.h.b16 %v227
        %v314 = vunpack.c.l.b16 %v228
        %v315 = vunpack.c.h.b16 %v228
        %v316 = vunpack.c.l.b16 %v229
        %v317 = vunpack.c.h.b16 %v229
        %v318 = vpack.c.b16 %v306, %v302
        %v319 = vpack.c.b16 %v307, %v303
        %v320 = vpack.c.b16 %v308, %v304
        %v321 = vpack.c.b16 %v309, %v305
        %v322 = vpack.c.b16 %v314, %v310
        %v323 = vpack.c.b16 %v315, %v311
        %v324 = vpack.c.b16 %v316, %v312
        %v325 = vpack.c.b16 %v317, %v313
        %v398 = vunpack.c.l.b16 %v230
        %v399 = vunpack.c.l.b16 %v231
        %v400 = vunpack.c.l.b16 %v232
        %v401 = vunpack.c.l.b16 %v233
        %v402 = vunpack.c.l.b16 %v234
        %v403 = vunpack.c.l.b16 %v235
        %v404 = vunpack.c.l.b16 %v236
        %v405 = vunpack.c.l.b16 %v237
        %v406 = vunpack.c.l.b16 %v238
        %v407 = vunpack.c.l.b16 %v239
        %v408 = vunpack.c.l.b16 %v240
        %v409 = vunpack.c.l.b16 %v241
        %v410 = vunpack.c.l.b16 %v242
        %v411 = vunpack.c.l.b16 %v243
        %v412 = vunpack.c.l.b16 %v244
        %v413 = vunpack.c.l.b16 %v245
        %v414 = vunpack.c.l.b16 %v246
        %v415 = vunpack.c.l.b16 %v247
        %v416 = vunpack.c.l.b16 %v248
        %v417 = vunpack.c.l.b16 %v249
        %v418 = vunpack.c.l.b16 %v250
        %v419 = vunpack.c.l.b16 %v251
        %v420 = vunpack.c.l.b16 %v252
        %v421 = vunpack.c.l.b16 %v253
        %v422 = vunpack.c.l.b16 %v254
        %v423 = vunpack.c.l.b16 %v255
        %v424 = vunpack.c.l.b16 %v256
        %v425 = vunpack.c.l.b16 %v257
        %v426 = vunpack.c.l.b16 %v258
        %v427 = vunpack.c.l.b16 %v259
        %v428 = vunpack.c.l.b16 %v260
        %v429 = vunpack.c.l.b16 %v261
        %v430 = vunpack.c.l.b16 %v262
        %v431 = vunpack.c.l.b16 %v263
        %v432 = vunpack.c.l.b16 %v264
        %v433 = vunpack.c.l.b16 %v265
        %v434 = vunpack.c.l.b16 %v266
        %v435 = vunpack.c.l.b16 %v267
        %v436 = vunpack.c.l.b16 %v268
        %v437 = vunpack.c.l.b16 %v269
        %v438 = vunpack.c.l.b16 %v270
        %v439 = vunpack.c.l.b16 %v271
        %v440 = vunpack.c.l.b16 %v272
        %v441 = vunpack.c.l.b16 %v273
        %v442 = vunpack.c.l.b16 %v274
        %v443 = vunpack.c.l.b16 %v275
        %v444 = vunpack.c.l.b16 %v276
        %v445 = vunpack.c.l.b16 %v277
        %v446 = vunpack.c.l.b16 %v278
        %v447 = vunpack.c.l.b16 %v279
        %v448 = vunpack.c.l.b16 %v280
        %v449 = vunpack.c.l.b16 %v281
        %v450 = vunpack.c.l.b16 %v282
        %v451 = vunpack.c.l.b16 %v283
        %v452 = vunpack.c.l.b16 %v284
        %v453 = vunpack.c.l.b16 %v285
        %v454 = vunpack.c.l.b16 %v286
        %v455 = vunpack.c.l.b16 %v287
        %v456 = vunpack.c.l.b16 %v288
        %v457 = vunpack.c.l.b16 %v289
        %v458 = vunpack.c.l.b16 %v290
        %v459 = vunpack.c.l.b16 %v291
        %v460 = vunpack.c.l.b16 %v292
        %v461 = vunpack.c.l.b16 %v293
        %v462 = vpack.c.b16 %v399, %v398
        %v463 = vpack.c.b16 %v401, %v400
        %v464 = vpack.c.b16 %v403, %v402
        %v465 = vpack.c.b16 %v405, %v404
        %v466 = vpack.c.b16 %v407, %v406
        %v467 = vpack.c.b16 %v409, %v408
        %v468 = vpack.c.b16 %v411, %v410
        %v469 = vpack.c.b16 %v413, %v412
        %v470 = vpack.c.b16 %v415, %v414
        %v471 = vpack.c.b16 %v417, %v416
        %v472 = vpack.c.b16 %v419, %v418
        %v473 = vpack.c.b16 %v421, %v420
        %v474 = vpack.c.b16 %v423, %v422
        %v475 = vpack.c.b16 %v425, %v424
        %v476 = vpack.c.b16 %v427, %v426
        %v477 = vpack.c.b16 %v429, %v428
        %v478 = vpack.c.b16 %v431, %v430
        %v479 = vpack.c.b16 %v433, %v432
        %v480 = vpack.c.b16 %v435, %v434
        %v481 = vpack.c.b16 %v437, %v436
        %v482 = vpack.c.b16 %v439, %v438
        %v483 = vpack.c.b16 %v441, %v440
        %v484 = vpack.c.b16 %v443, %v442
        %v485 = vpack.c.b16 %v445, %v444
        %v486 = vpack.c.b16 %v447, %v446
        %v487 = vpack.c.b16 %v449, %v448
        %v488 = vpack.c.b16 %v451, %v450
        %v489 = vpack.c.b16 %v453, %v452
        %v490 = vpack.c.b16 %v455, %v454
        %v491 = vpack.c.b16 %v457, %v456
        %v492 = vpack.c.b16 %v459, %v458
        %v493 = vpack.c.b16 %v461, %v460
        %526 = vmatpush.bf16.msra.mxu0 %v469
        %527 = vmatpush.bf16.msra.mxu0 %v468
        %528 = vmatpush.bf16.msra.mxu0 %v467
        %529 = vmatpush.bf16.msra.mxu0 %v466
        %530 = vmatpush.bf16.msra.mxu0 %v465
        %531 = vmatpush.bf16.msra.mxu0 %v464
        %532 = vmatpush.bf16.msra.mxu0 %v463
        %533 = vmatpush.bf16.msra.mxu0 %v462
        %534 = vmatmul.bf16.gmra.mxu0 %v318
        %v535 = vpop.f32.mrf.mxu0
        %v536 = vadd.f32 0.0, %v535
        %v537 = vpop.f32.mrf.mxu0
        %v538 = vadd.f32 0.0, %v537
        %539 = vmatmul.bf16.gmra.mxu0 %v322
        %v540 = vpop.f32.mrf.mxu0
        %v541 = vadd.f32 0.0, %v540
        %v542 = vpop.f32.mrf.mxu0
        %v543 = vadd.f32 0.0, %v542
        %544 = vdwg.mxu0
        %545 = vmatpush.bf16.msra.mxu0 %v477
        %546 = vmatpush.bf16.msra.mxu0 %v476
        %547 = vmatpush.bf16.msra.mxu0 %v475
        %548 = vmatpush.bf16.msra.mxu0 %v474
        %549 = vmatpush.bf16.msra.mxu0 %v473
        %550 = vmatpush.bf16.msra.mxu0 %v472
        %551 = vmatpush.bf16.msra.mxu0 %v471
        %552 = vmatpush.bf16.msra.mxu0 %v470
        %553 = vmatmul.bf16.gmra.mxu0 %v319
        %v554 = vpop.f32.mrf.mxu0
        %v555 = vadd.f32 %v536, %v554
        %v556 = vpop.f32.mrf.mxu0
        %v557 = vadd.f32 %v538, %v556
        %558 = vmatmul.bf16.gmra.mxu0 %v323
        %v559 = vpop.f32.mrf.mxu0
        %v560 = vadd.f32 %v541, %v559
        %v561 = vpop.f32.mrf.mxu0
        %v562 = vadd.f32 %v543, %v561
        %563 = vdwg.mxu0
        %564 = vmatpush.bf16.msra.mxu0 %v485
        %565 = vmatpush.bf16.msra.mxu0 %v484
        %566 = vmatpush.bf16.msra.mxu0 %v483
        %567 = vmatpush.bf16.msra.mxu0 %v482
        %568 = vmatpush.bf16.msra.mxu0 %v481
        %569 = vmatpush.bf16.msra.mxu0 %v480
        %570 = vmatpush.bf16.msra.mxu0 %v479
        %571 = vmatpush.bf16.msra.mxu0 %v478
        %572 = vmatmul.bf16.gmra.mxu0 %v320
        %v573 = vpop.f32.mrf.mxu0
        %v574 = vadd.f32 %v555, %v573
        %v575 = vpop.f32.mrf.mxu0
        %v576 = vadd.f32 %v557, %v575
        %577 = vmatmul.bf16.gmra.mxu0 %v324
        %v578 = vpop.f32.mrf.mxu0
        %v579 = vadd.f32 %v560, %v578
        %v580 = vpop.f32.mrf.mxu0
        %v581 = vadd.f32 %v562, %v580
        %582 = vdwg.mxu0
        %583 = vmatpush.bf16.msra.mxu0 %v493
        %584 = vmatpush.bf16.msra.mxu0 %v492
        %585 = vmatpush.bf16.msra.mxu0 %v491
        %586 = vmatpush.bf16.msra.mxu0 %v490
        %587 = vmatpush.bf16.msra.mxu0 %v489
        %588 = vmatpush.bf16.msra.mxu0 %v488
        %589 = vmatpush.bf16.msra.mxu0 %v487
        %590 = vmatpush.bf16.msra.mxu0 %v486
        %591 = vmatmul.bf16.gmra.mxu0 %v321
        %v592 = vpop.f32.mrf.mxu0
        %v593 = vadd.f32 %v574, %v592
        %v594 = vpop.f32.mrf.mxu0
        %v595 = vadd.f32 %v576, %v594
        %596 = vmatmul.bf16.gmra.mxu0 %v325
        %v597 = vpop.f32.mrf.mxu0
        %v598 = vadd.f32 %v579, %v597
        %v599 = vpop.f32.mrf.mxu0
        %v600 = vadd.f32 %v581, %v599
        %601 = vdwg.mxu0
        %v602 = vpack.c.bf16 %v593, %v593
        %v603 = vpack.c.bf16 %v595, %v595
        %v604 = vpack.c.bf16 %v598, %v598
        %v605 = vpack.c.bf16 %v600, %v600
        %606 = vst [vmem:[%s212] sm:$0xf] %v602
        %607 = vst [vmem:[%s212 + $0x4] sm:$0xf] %v603
        %608 = vst [vmem:[%s212 + $0x8] sm:$0xf] %v604
        %609 = vst [vmem:[%s212 + $0xc] sm:$0xf] %v605
        %v610 = vadd.f32 %v593, %v595
        %v611 = vadd.f32 %v610, %v598
        %v612 = vadd.f32 %v611, %v600
        %v613 = vrot.slane %v612, 4
        %v614 = vadd.f32 %v612, %v613
        %v615 = vrot.slane %v614, 2
        %v616 = vadd.f32 %v614, %v615
        %v617 = vrot.slane %v616, 1
        %v618 = vadd.f32 %v616, %v617
        %v619 = vmul.f32 %v593, %v593
        %v620 = vmul.f32 %v595, %v595
        %v621 = vmul.f32 %v598, %v598
        %v622 = vmul.f32 %v600, %v600
        %v623 = vadd.f32 %v619, %v620
        %v624 = vadd.f32 %v623, %v621
        %v625 = vadd.f32 %v624, %v622
        %v626 = vrot.slane %v625, 4
        %v627 = vadd.f32 %v625, %v626
        %v628 = vrot.slane %v627, 2
        %v629 = vadd.f32 %v627, %v628
        %v630 = vrot.slane %v629, 1
        %v631 = vadd.f32 %v629, %v630
        %vm632 = vcmask 1040384
        %v633 = vsel %vm632, %v618, %v631
        %vm634 = vcmask 1041408
        %v635 = vsel %vm634, %v633, 0.0
        %636 = vst [vmem:[%s219] sm:$0xff] %v635
        %s637 = sand.u32 %s80, 1
        %s638 = scalar_lea.sflag [#allocation4], %s637
        %s639 = sand.u32 %s80, 1
        %s640 = smul.addr %s639, 16
        %s641 = scalar_lea.vmem [#allocation7], %s640
        %s642 = sand.u32 %s106, 1
        %s643 = scalar_lea.sflag [#allocation9], %s642
        %s644 = sand.u32 %s106, 1
        %s645 = smul.addr %s644, 8
        %s646 = scalar_lea.vmem [#allocation8], %s645
        // Predicated region
        $region37: #{tpu_custom_call.1} parent=27 // pred_check
          %p647 = pneg %p90
        $region38: #{tpu_custom_call.1} parent=27 // pred_check_branch
          %649 = sbr.rel (%p647) target = $region40
        $region39: #{tpu_custom_call.1} parent=27 // pred_region
          %s650 = smul.u32 4, %s25
          %652 = vsyncadd %s638, 0
          %s653 = smul.addr %s650, 4
          %s654 = scalar_lea.hbm %s2, %s653
          %s655 = sshll.u32 %s641, 4
          %s656 = int_to_ptr.vmem [resolvable:$true] %s655
          %s657 = sshll.u32 %s654, 4
          %s658 = int_to_ptr.hbm [resolvable:$true] %s657
          %663 = dma.vmem_to_hbm [thread:$0]  %s656, 256, %s658, %s638, 64, 64, 4
        $region40: #{tpu_custom_call.1} parent=27 // pred_fallthru
          _
        // Predicated region
        $region41: #{tpu_custom_call.1} parent=27 // pred_check
          %p664 = pneg %p116
        $region42: #{tpu_custom_call.1} parent=27 // pred_check_branch
          %666 = sbr.rel (%p664) target = $region44
        $region43: #{tpu_custom_call.1} parent=27 // pred_region
          %668 = vsyncadd %s643, 0
          %s669 = smul.addr %s25, 8
          %s670 = scalar_lea.hbm %s3, %s669
          %s672 = sshll.u32 %s646, 4
          %s673 = int_to_ptr.vmem [resolvable:$true] %s672
          %s674 = sshll.u32 %s670, 4
          %s675 = int_to_ptr.hbm [resolvable:$true] %s674
          %677 = dma.vmem_to_hbm [thread:$0]  %s673, 128, %s675, %s643
        $region44: #{tpu_custom_call.1} parent=27 // pred_fallthru
          _
      $region28: #{tpu_custom_call.1} parent=5 // pred_fallthru
        _
      %p678 = scmp.le.s32.totalorder 2, %s20
      // Predicated region
      $region45: #{tpu_custom_call.1} parent=5 // pred_check
        %p679 = pneg %p678
      $region46: #{tpu_custom_call.1} parent=5 // pred_check_branch
        %681 = sbr.rel (%p679) target = $region48
      $region47: #{tpu_custom_call.1} parent=5 // pred_region
        %s682 = ssub.s32 %s20, 2
        // Predicated region
        $region49: #{tpu_custom_call.1} parent=47 // pred_check
          %p683 = pneg %p96
        $region50: #{tpu_custom_call.1} parent=47 // pred_check_branch
          %685 = sbr.rel (%p683) target = $region52
        $region51: #{tpu_custom_call.1} parent=47 // pred_region
          %s686 = sand.u32 %s81, 1
          %s687 = scalar_lea.sflag [#allocation4], %s686
          %s688 = sand.u32 %s81, 1
          %s689 = smul.addr %s688, 16
          %s690 = scalar_lea.vmem [#allocation7], %s689
          %692 = dma.done %s687, 256
        $region52: #{tpu_custom_call.1} parent=47 // pred_fallthru
          _
        // Predicated region
        $region53: #{tpu_custom_call.1} parent=47 // pred_check
          %p693 = pneg %p122
        $region54: #{tpu_custom_call.1} parent=47 // pred_check_branch
          %695 = sbr.rel (%p693) target = $region56
        $region55: #{tpu_custom_call.1} parent=47 // pred_region
          %s696 = sand.u32 %s107, 1
          %s697 = scalar_lea.sflag [#allocation9], %s696
          %s698 = sand.u32 %s107, 1
          %s699 = smul.addr %s698, 8
          %s700 = scalar_lea.vmem [#allocation8], %s699
          %702 = dma.done %s697, 128
        $region56: #{tpu_custom_call.1} parent=47 // pred_fallthru
          _
      $region48: #{tpu_custom_call.1} parent=5 // pred_fallthru
        _
    $region6: #{tpu_custom_call.1} parent=1 // loop_footer
      %s24 = sadd.s32 1, %s20
    $region7: #{tpu_custom_call.1} parent=1 // loop_footer_branch
      %19 = sbr.rel target = $region3
    $region8: #{tpu_custom_call.1} parent=1 // loop_exit
      _
    %703 = vsyncpa [#allocation3], 1
    %s704 = scalar_lea.sflag [#allocation3], 1
    %705 = vsyncpa %s704, 1
    %706 = vsyncpa [#allocation6], 1
    %707 = vsyncpa [#allocation4], 1
    %s708 = scalar_lea.sflag [#allocation4], 1
    %709 = vsyncpa %s708, 1
    %710 = vsyncpa [#allocation9], 1
    %s711 = scalar_lea.sflag [#allocation9], 1
    %712 = vsyncpa %s711, 1

</llo_original>
